<compile_context>
chip_gen: v5e
topology: v5e:2x2
jax: 0.10.0
libtpu: 0.0.40
codegen_flags: <defaults>
</compile_context>

<pallas_src>
import functools

import jax
import jax.numpy as jnp
from jax.experimental import pallas as pl
from jax.experimental.pallas import tpu as pltpu

IN_DIM = 4
HIDDEN = 256
OUT_DIM = 2


def policy_kernel(x_ref, w1_ref, b1_ref, wd_ref, bd_ref, o_ref):
    # x_ref : (TB, 4)    VMEM
    # w1_ref: (4, 256)   VMEM   (torch affine1 weight transposed: in x out)
    # b1_ref: (1, 256)   VMEM
    # wd_ref: (1, 256)   VMEM   (w2[1] - w2[0])
    # bd_ref: (1,)       SMEM   (b2[1] - b2[0])
    # o_ref : (TB, 2)    VMEM
    x = x_ref[...]                                             # (TB, 4)

    # --- affine1 on the MXU (idle otherwise, even at K=4), bias + ReLU on VPU.
    # Dropout (eval mode) is identity.
    h = jnp.dot(x, w1_ref[...], preferred_element_type=jnp.float32) + b1_ref[...]
    h = jnp.maximum(h, 0.0)                                    # (TB, 256)

    # --- affine2 + 2-class softmax fused: softmax(l)[1] = sigmoid(l1 - l0)
    d = jnp.sum(h * wd_ref[...], axis=-1, keepdims=True) + bd_ref[0]   # (TB, 1)
    p1 = 1.0 / (1.0 + jnp.exp(-d))                             # = softmax(logits)[:, 1]
    p0 = 1.0 - p1                                              # exactly normalized

    # --- single store of the whole (TB, 2) tile (halves masked-store count).
    o_ref[...] = jnp.concatenate([p0, p1], axis=1).astype(o_ref.dtype)


def _round_up(n, m):
    return ((n + m - 1) // m) * m


@functools.partial(jax.jit, static_argnames=("block_b",))
def policy_forward(x, w1, b1, w_diff, b_diff, *, block_b=1024):
    B = x.shape[0]
    # Batch tile: multiple of 8 sublanes, capped at block_b, and sized to
    # ceil(B/2) so the parallel grid has >= 2 steps whenever B >= 16
    # (v7x megacore sharding). Per-tile VMEM at tb=1024 is only a few MiB,
    # well under v5e's 16 MiB default scoped limit.
    tb = min(block_b, max(8, _round_up(pl.cdiv(B, 2), 8)))
    grid = (pl.cdiv(B, tb),)   # ragged last block handled by Pallas

    return pl.pallas_call(
        policy_kernel,
        out_shape=jax.ShapeDtypeStruct((B, OUT_DIM), jnp.float32),
        grid=grid,
        in_specs=[
            pl.BlockSpec((tb, IN_DIM), lambda i: (i, 0)),
            pl.BlockSpec((IN_DIM, HIDDEN), lambda i: (0, 0)),
            pl.BlockSpec((1, HIDDEN), lambda i: (0, 0)),
            pl.BlockSpec((1, HIDDEN), lambda i: (0, 0)),
            pl.BlockSpec(memory_space=pltpu.MemorySpace.SMEM),
        ],
        out_specs=pl.BlockSpec((tb, OUT_DIM), lambda i: (i, 0)),
        compiler_params=pltpu.CompilerParams(
            dimension_semantics=("parallel",)),
    )(x, w1, b1, w_diff, b_diff)


def init_params(key):
    """Deterministic init mimicking nn.Linear (uniform in +/- 1/sqrt(fan_in))."""
    k1, k2, k3, k4 = jax.random.split(key, 4)
    lim1 = 1.0 / jnp.sqrt(jnp.float32(IN_DIM))
    lim2 = 1.0 / jnp.sqrt(jnp.float32(HIDDEN))
    # affine1 weight stored transposed (in, out); affine2 kept in torch (out, in) layout
    w1 = jax.random.uniform(k1, (IN_DIM, HIDDEN), jnp.float32, -lim1, lim1)
    b1 = jax.random.uniform(k2, (1, HIDDEN), jnp.float32, -lim1, lim1)
    w2 = jax.random.uniform(k3, (OUT_DIM, HIDDEN), jnp.float32, -lim2, lim2)
    b2 = jax.random.uniform(k4, (OUT_DIM,), jnp.float32, -lim2, lim2)
    return w1, b1, w2, b2


def prepare_params(w2, b2):
    """One-time precompute of the fused affine2+softmax parameters."""
    w_diff = (w2[1:2, :] - w2[0:1, :]).astype(jnp.float32)      # (1, 256)
    b_diff = (b2[1] - b2[0]).reshape(1).astype(jnp.float32)     # (1,)  -> SMEM
    return w_diff, b_diff


def policy_ref(x, w1, b1, w2, b2):
    h = jnp.maximum(x @ w1 + b1, 0.0)
    logits = h @ w2.T + b2
    return jax.nn.softmax(logits, axis=-1)


if __name__ == "__main__":
    key = jax.random.PRNGKey(0)
    kx, kx2, kp = jax.random.split(key, 3)

    w1, b1, w2, b2 = init_params(kp)
    w_diff, b_diff = prepare_params(w2, b2)

    # Small batch; CartPole observations are 4-dim.
    B = 8
    x = jax.random.normal(kx, (B, IN_DIM), jnp.float32)
    out = policy_forward(x, w1, b1, w_diff, b_diff)
    jax.block_until_ready(out)

    ref = policy_ref(x, w1, b1, w2, b2)
    assert out.shape == (B, OUT_DIM)
    # MXU f32 matmul decomposition may differ slightly from XLA's reference dot;
    # keep a tight-but-not-bitwise tolerance.
    assert jnp.allclose(out, ref, atol=1e-4, rtol=1e-4), "mismatch vs. JAX reference"
    assert jnp.allclose(jnp.sum(out, axis=-1), 1.0, atol=1e-5), "rows must sum to 1"

    # Exercise the multi-step grid (>= 2 steps, v7x path) and ragged last block.
    B2 = 200
    x2 = jax.random.normal(kx2, (B2, IN_DIM), jnp.float32)
    out2 = policy_forward(x2, w1, b1, w_diff, b_diff)
    jax.block_until_ready(out2)
    ref2 = policy_ref(x2, w1, b1, w2, b2)
    assert out2.shape == (B2, OUT_DIM)
    assert jnp.allclose(out2, ref2, atol=1e-4, rtol=1e-4), "mismatch (ragged grid)"

    print("KERNEL_OK")
</pallas_src>

<mosaic_0001>
module attributes {stable_mosaic.version = 11 : i64} {
  func.func @policy_kernel(%arg0: i32, %arg1: memref<8x4xf32, #tpu.memory_space<vmem>>, %arg2: memref<4x256xf32, #tpu.memory_space<vmem>>, %arg3: memref<1x256xf32, #tpu.memory_space<vmem>>, %arg4: memref<1x256xf32, #tpu.memory_space<vmem>>, %arg5: memref<1xf32, #tpu.memory_space<smem>>, %arg6: memref<8x2xf32, #tpu.memory_space<vmem>>) attributes {dimension_semantics = [#tpu.dimension_semantics<parallel>], iteration_bounds = array<i64: 1>, scalar_prefetch = 0 : i64, scratch_operands = 0 : i64, tpu.core_type = #tpu.core_type<tc>, window_params = [{transform_indices = @transform_0, window_bounds = array<i64: 8, 4>}, {pipeline_mode = #tpu.pipeline_mode<synchronous>, transform_indices = @transform_1, window_bounds = array<i64: 4, 256>}, {pipeline_mode = #tpu.pipeline_mode<synchronous>, transform_indices = @transform_2, window_bounds = array<i64: 1, 256>}, {pipeline_mode = #tpu.pipeline_mode<synchronous>, transform_indices = @transform_3, window_bounds = array<i64: 1, 256>}, {transform_indices = @transform_4, window_bounds = array<i64: 1>}, {transform_indices = @transform_5, window_bounds = array<i64: 8, 2>}]} {
    %c0 = arith.constant 0 : index
    %c0_0 = arith.constant 0 : index
    %0 = vector.load %arg1[%c0, %c0_0] : memref<8x4xf32, #tpu.memory_space<vmem>>, vector<8x4xf32>
    %c0_1 = arith.constant 0 : index
    %c0_2 = arith.constant 0 : index
    %1 = vector.load %arg2[%c0_1, %c0_2] : memref<4x256xf32, #tpu.memory_space<vmem>>, vector<4x256xf32>
    %cst = arith.constant dense<0.000000e+00> : vector<8x256xf32>
    %2 = tpu.matmul %0, %1, %cst {dimension_numbers = #tpu.dot_dimension_numbers<[1], [0], [0], [1], [0, 0, 1, 1], [], []>} : vector<8x4xf32>, vector<4x256xf32>, vector<8x256xf32> -> vector<8x256xf32>
    %c0_3 = arith.constant 0 : index
    %c0_4 = arith.constant 0 : index
    %3 = vector.load %arg3[%c0_3, %c0_4] : memref<1x256xf32, #tpu.memory_space<vmem>>, vector<1x256xf32>
    %4 = vector.broadcast %3 : vector<1x256xf32> to vector<8x256xf32>
    %5 = arith.addf %2, %4 : vector<8x256xf32>
    %cst_5 = arith.constant 0.000000e+00 : f32
    %6 = vector.broadcast %cst_5 : f32 to vector<8x256xf32>
    %7 = arith.maximumf %5, %6 : vector<8x256xf32>
    %c0_6 = arith.constant 0 : index
    %c0_7 = arith.constant 0 : index
    %8 = vector.load %arg4[%c0_6, %c0_7] : memref<1x256xf32, #tpu.memory_space<vmem>>, vector<1x256xf32>
    %9 = vector.broadcast %8 : vector<1x256xf32> to vector<8x256xf32>
    %10 = arith.mulf %7, %9 : vector<8x256xf32>
    %cst_8 = arith.constant dense<0.000000e+00> : vector<8xf32>
    %11 = vector.multi_reduction <add>, %10, %cst_8 [1] : vector<8x256xf32> to vector<8xf32>
    %12 = vector.shape_cast %11 : vector<8xf32> to vector<8x1xf32>
    %c0_9 = arith.constant 0 : index
    %13 = memref.load %arg5[%c0_9] : memref<1xf32, #tpu.memory_space<smem>>
    %14 = vector.broadcast %13 : f32 to vector<8x1xf32>
    %15 = arith.addf %12, %14 : vector<8x1xf32>
    %cst_10 = arith.constant 0.000000e+00 : f32
    %16 = vector.broadcast %cst_10 : f32 to vector<8x1xf32>
    %17 = arith.subf %16, %15 : vector<8x1xf32>
    %18 = math.exp %17 : vector<8x1xf32>
    %cst_11 = arith.constant 1.000000e+00 : f32
    %19 = vector.broadcast %cst_11 : f32 to vector<8x1xf32>
    %20 = arith.addf %19, %18 : vector<8x1xf32>
    %cst_12 = arith.constant 1.000000e+00 : f32
    %21 = vector.broadcast %cst_12 : f32 to vector<8x1xf32>
    %22 = arith.divf %21, %20 : vector<8x1xf32>
    %cst_13 = arith.constant 1.000000e+00 : f32
    %23 = vector.broadcast %cst_13 : f32 to vector<8x1xf32>
    %24 = arith.subf %23, %22 : vector<8x1xf32>
    %25 = tpu.concatenate %24, %22 in 1 : vector<8x1xf32>, vector<8x1xf32> -> vector<8x2xf32>
    %c0_14 = arith.constant 0 : index
    %c0_15 = arith.constant 0 : index
    %26 = vector.load %arg6[%c0_14, %c0_15] : memref<8x2xf32, #tpu.memory_space<vmem>>, vector<8x2xf32>
    tpu.vector_store %arg6[%c0_14, %c0_15], %25 {strides = array<i32>} : memref<8x2xf32, #tpu.memory_space<vmem>>, vector<8x2xf32>,
    return
  }
  func.func @transform_0(%arg0: i32) -> (i32, i32) {
    %c0_i32 = arith.constant 0 : i32
    %c0_i32_0 = arith.constant 0 : i32
    return %arg0, %c0_i32 : i32, i32
  }
  func.func @transform_1(%arg0: i32) -> (i32, i32) {
    %c0_i32 = arith.constant 0 : i32
    %c0_i32_0 = arith.constant 0 : i32
    %c0_i32_1 = arith.constant 0 : i32
    return %c0_i32, %c0_i32_0 : i32, i32
  }
  func.func @transform_2(%arg0: i32) -> (i32, i32) {
    %c0_i32 = arith.constant 0 : i32
    %c0_i32_0 = arith.constant 0 : i32
    %c0_i32_1 = arith.constant 0 : i32
    return %c0_i32, %c0_i32_0 : i32, i32
  }
  func.func @transform_3(%arg0: i32) -> (i32, i32) {
    %c0_i32 = arith.constant 0 : i32
    %c0_i32_0 = arith.constant 0 : i32
    %c0_i32_1 = arith.constant 0 : i32
    return %c0_i32, %c0_i32_0 : i32, i32
  }
  func.func @transform_4(%arg0: i32) -> i32 {
    %c0_i32 = arith.constant 0 : i32
    %c0_i32_0 = arith.constant 0 : i32
    return %c0_i32 : i32
  }
  func.func @transform_5(%arg0: i32) -> (i32, i32) {
    %c0_i32 = arith.constant 0 : i32
    %c0_i32_0 = arith.constant 0 : i32
    return %arg0, %c0_i32 : i32, i32
  }
}

</mosaic_0001>

<llo_original>
// kernel: policy_forward.1
$region0: #{policy_forward.1}
  #allocation0 [shape = 'u32[]', space=smem, size = 0x4, offset = 0x4, fixed_abs, tag = 'smem constant byte address 0x4 - core index']
  #allocation1 [shape = 'u32[72,128]{1,0:T(1,128)}', space=vmem, size = 0x9000, scoped, tag = 'internal scratch']
  #allocation2 [shape = 'f32[1]{0:T(128)S(6)}', space=smem, size = 0x200, scoped, tag = 'scoped memory for policy_forward.1']
  %s0 = inlined_call_operand.vmem [shape: f32[8,4], index: 0, kind: input, shape index: {}]
  %s1 = inlined_call_operand.vmem [shape: f32[4,256], index: 1, kind: input, shape index: {}]
  %s2 = inlined_call_operand.vmem [shape: f32[1,256], index: 2, kind: input, shape index: {}]
  %s3 = inlined_call_operand.vmem [shape: f32[1,256], index: 3, kind: input, shape index: {}]
  %s4 = inlined_call_operand.<no memory space> [shape: f32[1], index: 4, kind: input, shape index: {}]
  %s5 = inlined_call_operand.vmem [shape: f32[8,2], index: 5, kind: output, shape index: {}]
  %s6 = sld [smem:[#allocation0]]
  $region30: #{policy_forward.1} parent=0
    _
  %s8 = ssub.s32 1, %s6
  %s9 = scalar_select 0, %s8, %s6
  %10 = sst [smem:[#allocation2]] %s4
  // Predicated region
  $region2: #{policy_forward.1} parent=0 // pred_check
    _
  $region3: #{policy_forward.1} parent=0 // pred_check_branch
    %12 = sbr.rel (0) target = $region5
  $region4: #{policy_forward.1} parent=0 // pred_region
    _
  $region5: #{policy_forward.1} parent=0 // pred_fallthru
    _
  // Predicated region
  $region6: #{policy_forward.1} parent=0 // pred_check
    _
  $region7: #{policy_forward.1} parent=0 // pred_check_branch
    %14 = sbr.rel (0) target = $region9
  $region8: #{policy_forward.1} parent=0 // pred_region
    _
  $region9: #{policy_forward.1} parent=0 // pred_fallthru
    _
  // Predicated region
  $region10: #{policy_forward.1} parent=0 // pred_check
    _
  $region11: #{policy_forward.1} parent=0 // pred_check_branch
    %16 = sbr.rel (0) target = $region13
  $region12: #{policy_forward.1} parent=0 // pred_region
    _
  $region13: #{policy_forward.1} parent=0 // pred_fallthru
    _
  // Predicated region
  $region14: #{policy_forward.1} parent=0 // pred_check
    _
  $region15: #{policy_forward.1} parent=0 // pred_check_branch
    %18 = sbr.rel (0) target = $region17
  $region16: #{policy_forward.1} parent=0 // pred_region
    _
  $region17: #{policy_forward.1} parent=0 // pred_fallthru
    _
  // Predicated region
  $region18: #{policy_forward.1} parent=0 // pred_check
    _
  $region19: #{policy_forward.1} parent=0 // pred_check_branch
    %20 = sbr.rel (0) target = $region21
  $region20: #{policy_forward.1} parent=0 // pred_region
    _
  $region21: #{policy_forward.1} parent=0 // pred_fallthru
    _
  %v21 = vld [vmem:[%s0] sm:$0xff]
  %v22 = vld [vmem:[%s1] sm:$0xff]
  %v23 = vld [vmem:[%s2] sm:$0x3]
  %v25 = vperm.slane %v23, 0
  %v26 = vperm.slane %v23, 1
  %30 = vst [vmem:[#allocation1] ss:$2 sm:$0xff] %v22
  %v31 = vld.sshfl [vmem:[#allocation1] sm:$0xff pattern:$0x75316420]
  %v32 = vld.sshfl [vmem:[#allocation1 + $0x8] sm:$0xff pattern:$0x75316420]
  %vm33 = vcmask 31744
  %v35 = vsel %vm33, %v21, 0
  %vm37 = vcmask 1043456
  %v38 = vsel %vm37, %v31, 0
  %v40 = vsel %vm37, %v32, 0
  %42 = vmatpush.msra.mxu0 0.0
  %43 = vmatpush.msra.mxu0 0.0
  %44 = vmatpush.msra.mxu0 0.0
  %45 = vmatpush.msra.mxu0 0.0
  %46 = vmatpush.msra.mxu0 0.0
  %47 = vmatpush.msra.mxu0 0.0
  %48 = vmatpush.msra.mxu0 0.0
  %49 = vmatpush.msra.mxu0 0.0
  %50 = vmatpush.msra.mxu0 0.0
  %51 = vmatpush.msra.mxu0 0.0
  %52 = vmatpush.msra.mxu0 0.0
  %53 = vmatpush.msra.mxu0 0.0
  %54 = vmatpush.msra.mxu0 0.0
  %55 = vmatpush.msra.mxu0 0.0
  %56 = vmatpush.msra.mxu0 0.0
  %57 = vmatpush.msra.mxu0 %v38
  %58 = vmatmul.f32.gmra.mxu0 %v35
  %v59 = vpop.f32.mrf.mxu0
  %v60 = vadd.f32 %v25, %v59
  %61 = vdwg.mxu0
  %62 = vmatpush.msra.mxu0 0.0
  %63 = vmatpush.msra.mxu0 0.0
  %64 = vmatpush.msra.mxu0 0.0
  %65 = vmatpush.msra.mxu0 0.0
  %66 = vmatpush.msra.mxu0 0.0
  %67 = vmatpush.msra.mxu0 0.0
  %68 = vmatpush.msra.mxu0 0.0
  %69 = vmatpush.msra.mxu0 0.0
  %70 = vmatpush.msra.mxu0 0.0
  %71 = vmatpush.msra.mxu0 0.0
  %72 = vmatpush.msra.mxu0 0.0
  %73 = vmatpush.msra.mxu0 0.0
  %74 = vmatpush.msra.mxu0 0.0
  %75 = vmatpush.msra.mxu0 0.0
  %76 = vmatpush.msra.mxu0 0.0
  %77 = vmatpush.msra.mxu0 %v40
  %78 = vmatmul.f32.gmra.mxu0 %v35
  %v79 = vpop.f32.mrf.mxu0
  %v80 = vadd.f32 %v26, %v79
  %81 = vdwg.mxu0
  %v82 = vmax.f32 %v60, 0.0
  %v83 = vmax.f32 %v80, 0.0
  %v84 = vld [vmem:[%s3] sm:$0x3]
  %v86 = vperm.slane %v84, 0
  %v87 = vperm.slane %v84, 1
  %v90 = vmul.f32 %v82, %v86
  %v91 = vmul.f32 %v83, %v87
  %v92 = vadd.f32 %v90, %v91
  %93 = vadd.xlane.f32.xlu0 %v92
  %v94 = vpop.xlane.xlu0 %93
  %s95 = sld [smem:[#allocation2]]
  %v96 = vstv %s95
  %v97 = vadd.f32 %v94, %v96
  %v98 = vsub.f32 0.0, %v97
  %v99 = vmul.f32 %v98, 1.442695
  %v100 = vpow.pop %v99
  %v101 = vadd.f32 %v100, 1.0
  %v102 = vrcp.pop %v101
  %v103 = vmul.f32 %v101, %v102
  %v104 = vsub.f32 1.0, %v103
  %v105 = vmul.f32 %v102, %v104
  %v106 = vadd.f32 %v102, %v105
  %vm107 = vweird.f32 %v101
  %vm108 = vweird.f32 %v102
  %vm109 = vmor %vm107, %vm108
  %v110 = vsel %vm109, %v102, %v106
  %v111 = vand.u32 2147483647, %v101
  %vm112 = vcmp.eq.f32.partialorder %v111, 8.507059e+37
  %v113 = vand.u32 %v101, 2147483648
  %v114 = vor.u32 1.1754944e-38, %v113
  %v115 = vsel %vm112, %v114, %v110
  %v116 = vmul.f32 1.0, %v115
  %v117 = vsub.f32 1.0, %v116
  %vm118 = vcmask 7168
  %v119 = vsel %vm118, %v117, %v116
  %vm120 = vcmask 15360
  %121 = vst.msk [vmem:[%s5] sm:$0xff] %vm120, %v119
  // Predicated region
  $region22: #{policy_forward.1} parent=0 // pred_check
    _
  $region23: #{policy_forward.1} parent=0 // pred_check_branch
    %123 = sbr.rel (0) target = $region25
  $region24: #{policy_forward.1} parent=0 // pred_region
    _
  $region25: #{policy_forward.1} parent=0 // pred_fallthru
    _
  // Predicated region
  $region26: #{policy_forward.1} parent=0 // pred_check
    _
  $region27: #{policy_forward.1} parent=0 // pred_check_branch
    %125 = sbr.rel (0) target = $region29
  $region28: #{policy_forward.1} parent=0 // pred_region
    _
  $region29: #{policy_forward.1} parent=0 // pred_fallthru
    _

</llo_original>
